<compile_context>
chip_gen: v7x
topology: tpu7x:2x2x1
jax: 0.10.0
libtpu: 0.0.40
codegen_flags: <defaults>
</compile_context>

<pallas_src>
import functools
import math

import jax
import jax.numpy as jnp
from jax.experimental import pallas as pl
from jax.experimental.pallas import tpu as pltpu


def _round_up(x, m):
    return ((x + m - 1) // m) * m


# ---------- Stage 1: support = features @ weight  (small, row-tiled) ----------
def _support_kernel(feat_ref, w_ref, out_ref):
    out_ref[...] = jnp.dot(
        feat_ref[...], w_ref[...], preferred_element_type=jnp.float32
    ).astype(out_ref.dtype)


# ---------- Stage 2: output = adj @ support + bias  (tiled + pipelined) ----------
def _aggregate_kernel(adj_ref, sup_ref, bias_ref, out_ref, acc_ref, *,
                      tk_e, resident):
    k = pl.program_id(1)

    @pl.when(k == 0)
    def _():
        # Seed the accumulator with the broadcast bias so the finalize step is
        # only a cast + lane-dense store.
        acc_ref[...] = jnp.broadcast_to(bias_ref[...], acc_ref.shape)

    if resident:
        # Support is fully resident in VMEM; slice the k-th reduction chunk.
        start = pl.multiple_of(k * tk_e, tk_e)
        sup = sup_ref[pl.ds(start, tk_e), :]
    else:
        sup = sup_ref[...]

    adj = adj_ref[...]
    if adj.dtype != sup.dtype:
        # Promote to the wider dtype in VMEM (preserves adj precision when a
        # normalized, non-integer adjacency arrives in f32).
        cd = jnp.promote_types(adj.dtype, sup.dtype)
        adj = adj.astype(cd)
        sup = sup.astype(cd)

    acc_ref[...] += jnp.dot(adj, sup, preferred_element_type=jnp.float32)

    @pl.when(k == pl.num_programs(1) - 1)
    def _():
        out_ref[...] = acc_ref[...].astype(out_ref.dtype)


def graph_convolution(features, adj, weight, bias=None, *,
                      tm=2048, tk=2048,
                      support_dtype=jnp.bfloat16,
                      resident_support=None,
                      vmem_limit_bytes=48 * 1024 * 1024):
    """output = adj @ (features @ weight) + bias, tiled/pipelined on TPU.

    adj is streamed in whatever dtype it arrives in (pre-cast it to bf16
    upstream when exact, e.g. an unnormalized {0,1,2} adjacency, to halve the
    dominant HBM stream).  support_dtype controls how the intermediate
    support matrix is stored/streamed (bf16 default; use f32 for full
    fidelity).  vmem_limit_bytes defaults to 48 MiB (safe on v7x's 64 MiB);
    v5e / v6e callers may raise it (128 MiB physical) for larger tiles or a
    fully resident support at larger N.
    """
    n, f_in = features.shape
    f_out = weight.shape[1]
    assert adj.shape == (n, n)
    assert tm % 128 == 0 and tk % 128 == 0 and tm >= 128 and tk >= 128

    f32 = jnp.float32
    sup_itemsize = jnp.dtype(support_dtype).itemsize
    adj_itemsize = jnp.dtype(adj.dtype).itemsize

    # Lane-dense output: pad F_out up to a multiple of 128 (unmasked vst).
    fp = _round_up(f_out, 128)

    # Clamp tiles for small problems; keep them multiples of 128 (=> bf16
    # sublane packing of 16 is automatically satisfied on the adj tiles).
    tm_e = min(tm, _round_up(n, 128))
    tk_e = min(tk, _round_up(n, 128))

    # Stage-2 VMEM working-set estimate (double-buffered inputs/outputs).
    def stage2_bytes(sup_rows):
        return (2 * tm_e * tk_e * adj_itemsize        # adj stream
                + 2 * sup_rows * fp * sup_itemsize    # support
                + 2 * tm_e * fp * 4                   # output
                + tm_e * fp * 4                       # f32 accumulator
                + 2 * fp * 4)                         # bias

    budget = int(0.85 * vmem_limit_bytes)
    # Shrink tiles (reduction axis first) until the tiled working set fits.
    while stage2_bytes(tk_e) > budget and tk_e > 128:
        tk_e = max(128, (tk_e // 2) // 128 * 128)
    while stage2_bytes(tk_e) > budget and tm_e > 128:
        tm_e = max(128, (tm_e // 2) // 128 * 128)

    # Force a divisor chain (min tile divides max tile) so padding N to
    # max(tm_e, tk_e) makes BOTH tiles divide n_pad.  This replaces the old
    # lcm-based rule that could blow adj up by orders of magnitude.
    if tm_e <= tk_e:
        tk_e = max(tm_e, (tk_e // tm_e) * tm_e)
    else:
        tm_e = max(tk_e, (tm_e // tk_e) * tk_e)
    n_pad = _round_up(n, max(tm_e, tk_e))

    # Resident support: fetch the whole support once (index_map always (0,0))
    # and slice per reduction step inside the kernel -> no re-streaming per
    # row tile.  Auto-enabled when it fits comfortably.
    if resident_support is None:
        resident_support = (n_pad * fp * sup_itemsize <= 16 * 1024 * 1024
                            and stage2_bytes(n_pad) <= budget)

    # ---- Stage-1 inputs (tiny; bf16 compute when support is stored bf16) ----
    s1_dtype = jnp.bfloat16 if support_dtype == jnp.bfloat16 else f32
    feat_p = jnp.pad(features.astype(s1_dtype), ((0, n_pad - n), (0, 0)))
    w_p = jnp.pad(weight.astype(s1_dtype), ((0, 0), (0, fp - f_out)))
    if bias is None:
        bias_p = jnp.zeros((1, fp), f32)
    else:
        bias_p = jnp.pad(bias.astype(f32).reshape(1, f_out),
                         ((0, 0), (0, fp - f_out)))
    # adj: no dtype cast in the wrapper (avoids an extra full HBM pass); pad
    # only when N is not tile-aligned.
    adj_p = adj if n_pad == n else jnp.pad(adj, ((0, n_pad - n), (0, n_pad - n)))

    # ---- Stage 1: support = features @ weight ----
    s1_tile = max(tm_e, tk_e)                  # divides n_pad by construction
    support = pl.pallas_call(
        _support_kernel,
        out_shape=jax.ShapeDtypeStruct((n_pad, fp), support_dtype),
        grid_spec=pltpu.PrefetchScalarGridSpec(
            num_scalar_prefetch=0,
            grid=(n_pad // s1_tile,),
            in_specs=[
                pl.BlockSpec((s1_tile, f_in), lambda i: (i, 0)),  # feature rows
                pl.BlockSpec((f_in, fp), lambda i: (0, 0)),       # full weight
            ],
            out_specs=pl.BlockSpec((s1_tile, fp), lambda i: (i, 0)),
        ),
        compiler_params=pltpu.CompilerParams(
            dimension_semantics=("parallel",),
            vmem_limit_bytes=vmem_limit_bytes,
        ),
    )(feat_p, w_p)

    # ---- Stage 2: out = adj @ support + bias ----
    if resident_support:
        sup_spec = pl.BlockSpec((n_pad, fp), lambda i, k: (0, 0))  # fetched once
    else:
        sup_spec = pl.BlockSpec((tk_e, fp), lambda i, k: (k, 0))

    kernel = functools.partial(_aggregate_kernel, tk_e=tk_e,
                               resident=resident_support)

    out_p = pl.pallas_call(
        kernel,
        out_shape=jax.ShapeDtypeStruct((n_pad, fp), jnp.float32),
        grid_spec=pltpu.PrefetchScalarGridSpec(
            num_scalar_prefetch=0,
            grid=(n_pad // tm_e, n_pad // tk_e),     # (row tiles, reduction)
            in_specs=[
                pl.BlockSpec((tm_e, tk_e), lambda i, k: (i, k)),  # adj tile
                sup_spec,                                          # support
                pl.BlockSpec((1, fp), lambda i, k: (0, 0)),        # bias
            ],
            out_specs=pl.BlockSpec((tm_e, fp), lambda i, k: (i, 0)),
            scratch_shapes=[pltpu.VMEM((tm_e, fp), jnp.float32)],
        ),
        compiler_params=pltpu.CompilerParams(
            dimension_semantics=("parallel", "arbitrary"),
            vmem_limit_bytes=vmem_limit_bytes,
        ),
    )(adj_p, support, bias_p)

    # TODO(synk): block-sparse skipping of all-zero adj tiles (scalar-prefetch
    # a compacted per-row-tile list of non-zero column blocks driving the adj
    # index_map) for realistic <1%-dense graphs; dense path implemented here.
    # TODO(synk): optional fp8 adj stream on v7x (exact for {0,1,2}) once the
    # operand-dtype combination is validated through Mosaic.
    return out_p[:n, :f_out]


if __name__ == "__main__":
    key = jax.random.PRNGKey(0)
    k_feat, k_adj, k_w, k_b = jax.random.split(key, 4)

    # ---- Test 1: 256 nodes, 32 -> 64 features, bf16 adj (pre-cast upstream,
    # exact for a {0,1,2} adjacency), auto resident-support path. ----
    N, F_IN, F_OUT = 256, 32, 64
    stdv = 1.0 / math.sqrt(F_OUT)
    weight = jax.random.uniform(k_w, (F_IN, F_OUT), dtype=jnp.float32,
                                minval=-stdv, maxval=stdv)
    bias = jax.random.uniform(k_b, (F_OUT,), dtype=jnp.float32,
                              minval=-stdv, maxval=stdv)
    features = jax.random.normal(k_feat, (N, F_IN), dtype=jnp.float32)
    adj_raw = jax.random.uniform(k_adj, (N, N), dtype=jnp.float32)
    adj = (adj_raw > 0.7).astype(jnp.float32) + jnp.eye(N, dtype=jnp.float32)
    adj_bf16 = adj.astype(jnp.bfloat16)       # exact; amortized across layers

    ref = adj @ (features @ weight) + bias

    out = graph_convolution(features, adj_bf16, weight, bias)
    out = jax.block_until_ready(out)
    assert out.shape == (N, F_OUT)
    assert jnp.allclose(out, ref, atol=5e-2, rtol=2e-2), float(
        jnp.max(jnp.abs(out - ref)))

    # ---- Test 2: force the tiled-support path (small tiles -> (2, 2) grid). ----
    out2 = graph_convolution(features, adj_bf16, weight, bias,
                             tm=128, tk=128, resident_support=False)
    out2 = jax.block_until_ready(out2)
    assert jnp.allclose(out2, ref, atol=5e-2, rtol=2e-2), float(
        jnp.max(jnp.abs(out2 - ref)))

    # ---- Test 3: unaligned N, no bias, f32 adj (mixed-dtype per-tile promote
    # path + pad-to-tile path; exercises the fixed padding rule). ----
    N3 = 200
    feat3 = features[:N3]
    adj3 = adj[:N3, :N3]
    ref3 = adj3 @ (feat3 @ weight)
    out3 = graph_convolution(feat3, adj3, weight, None)
    out3 = jax.block_until_ready(out3)
    assert out3.shape == (N3, F_OUT)
    assert jnp.allclose(out3, ref3, atol=5e-2, rtol=2e-2), float(
        jnp.max(jnp.abs(out3 - ref3)))

    print("KERNEL_OK")
</pallas_src>

<mosaic_0001>
module attributes {stable_mosaic.version = 11 : i64} {
  func.func @_support_kernel(%arg0: i32, %arg1: memref<256x32xbf16, #tpu.memory_space<vmem>>, %arg2: memref<32x128xbf16, #tpu.memory_space<vmem>>, %arg3: memref<256x128xbf16, #tpu.memory_space<vmem>>) attributes {dimension_semantics = [#tpu.dimension_semantics<parallel>], iteration_bounds = array<i64: 1>, scalar_prefetch = 0 : i64, scratch_operands = 0 : i64, tpu.core_type = #tpu.core_type<tc>, window_params = [{transform_indices = @transform_0, window_bounds = array<i64: 256, 32>}, {pipeline_mode = #tpu.pipeline_mode<synchronous>, transform_indices = @transform_1, window_bounds = array<i64: 32, 128>}, {transform_indices = @transform_2, window_bounds = array<i64: 256, 128>}]} {
    %c0 = arith.constant 0 : index
    %c0_0 = arith.constant 0 : index
    %0 = vector.load %arg1[%c0, %c0_0] : memref<256x32xbf16, #tpu.memory_space<vmem>>, vector<256x32xbf16>
    %c0_1 = arith.constant 0 : index
    %c0_2 = arith.constant 0 : index
    %1 = vector.load %arg2[%c0_1, %c0_2] : memref<32x128xbf16, #tpu.memory_space<vmem>>, vector<32x128xbf16>
    %cst = arith.constant dense<0.000000e+00> : vector<256x128xf32>
    %2 = tpu.matmul %0, %1, %cst {dimension_numbers = #tpu.dot_dimension_numbers<[1], [0], [0], [1], [0, 0, 1, 1], [], []>} : vector<256x32xbf16>, vector<32x128xbf16>, vector<256x128xf32> -> vector<256x128xf32>
    %3 = arith.truncf %2 : vector<256x128xf32> to vector<256x128xbf16>
    %c0_3 = arith.constant 0 : index
    %c0_4 = arith.constant 0 : index
    %4 = vector.load %arg3[%c0_3, %c0_4] : memref<256x128xbf16, #tpu.memory_space<vmem>>, vector<256x128xbf16>
    tpu.vector_store %arg3[%c0_3, %c0_4], %3 {strides = array<i32>} : memref<256x128xbf16, #tpu.memory_space<vmem>>, vector<256x128xbf16>,
    return
  }
  func.func @transform_0(%arg0: i32) -> (i32, i32) {
    %c0_i32 = arith.constant 0 : i32
    %c0_i32_0 = arith.constant 0 : i32
    return %arg0, %c0_i32 : i32, i32
  }
  func.func @transform_1(%arg0: i32) -> (i32, i32) {
    %c0_i32 = arith.constant 0 : i32
    %c0_i32_0 = arith.constant 0 : i32
    %c0_i32_1 = arith.constant 0 : i32
    return %c0_i32, %c0_i32_0 : i32, i32
  }
  func.func @transform_2(%arg0: i32) -> (i32, i32) {
    %c0_i32 = arith.constant 0 : i32
    %c0_i32_0 = arith.constant 0 : i32
    return %arg0, %c0_i32 : i32, i32
  }
}

</mosaic_0001>

<llo_original>
// kernel: tpu_custom_call.1
$region0: #{tpu_custom_call.1}
  #allocation0 [shape = 'u32[]', space=smem, size = 0x4, offset = 0x4, fixed_abs, tag = 'smem constant byte address 0x4 - core index']
  #allocation1 [shape = 'u32[144,128]{1,0:T(1,128)}', space=vmem, size = 0x12000, scoped, tag = 'internal scratch']
  %s0 = inlined_call_operand.vmem [shape: bf16[256,32], index: 0, kind: input, shape index: {}]
  %s1 = inlined_call_operand.vmem [shape: bf16[32,128], index: 1, kind: input, shape index: {}]
  %s2 = inlined_call_operand.hbm [shape: bf16[256,128], index: 2, kind: output, shape index: {}]
  %s3 = sld [smem:[#allocation0]]
  $region18: #{tpu_custom_call.1} parent=0
    _
  %s5 = ssub.s32 1, %s3
  %s6 = scalar_select 0, %s5, %s3
  $region1: #{tpu_custom_call.1} parent=0
    #allocation2 [shape = 'u8[65536]{0}', space=vmem, size = 0x10000, scoped, tag = 'output window, operand 0, single buffered']
    #allocation3 [shape = 's32[1]{0}', space=sflag, size = 0x4, scoped, tag = 'scoped memory for tpu_custom_call.1']
    %7 = vsyncpa [#allocation3], 0
    // Predicated region
    $region2: #{tpu_custom_call.1} parent=1 // pred_check
      _
    $region3: #{tpu_custom_call.1} parent=1 // pred_check_branch
      %9 = sbr.rel (0) target = $region5
    $region4: #{tpu_custom_call.1} parent=1 // pred_region
      _
    $region5: #{tpu_custom_call.1} parent=1 // pred_fallthru
      _
    // Predicated region
    $region6: #{tpu_custom_call.1} parent=1 // pred_check
      _
    $region7: #{tpu_custom_call.1} parent=1 // pred_check_branch
      %11 = sbr.rel (0) target = $region9
    $region8: #{tpu_custom_call.1} parent=1 // pred_region
      _
    $region9: #{tpu_custom_call.1} parent=1 // pred_fallthru
      _
    %v13 = vld [vmem:[%s0] sm:$0xf]
    %v14 = vld [vmem:[%s0 + $0x4] sm:$0xf]
    %v15 = vld [vmem:[%s0 + $0x8] sm:$0xf]
    %v16 = vld [vmem:[%s0 + $0xc] sm:$0xf]
    %v17 = vld [vmem:[%s0 + $0x10] sm:$0xf]
    %v18 = vld [vmem:[%s0 + $0x14] sm:$0xf]
    %v19 = vld [vmem:[%s0 + $0x18] sm:$0xf]
    %v20 = vld [vmem:[%s0 + $0x1c] sm:$0xf]
    %v21 = vld [vmem:[%s0 + $0x20] sm:$0xf]
    %v22 = vld [vmem:[%s0 + $0x24] sm:$0xf]
    %v23 = vld [vmem:[%s0 + $0x28] sm:$0xf]
    %v24 = vld [vmem:[%s0 + $0x2c] sm:$0xf]
    %v25 = vld [vmem:[%s0 + $0x30] sm:$0xf]
    %v26 = vld [vmem:[%s0 + $0x34] sm:$0xf]
    %v27 = vld [vmem:[%s0 + $0x38] sm:$0xf]
    %v28 = vld [vmem:[%s0 + $0x3c] sm:$0xf]
    %v29 = vld [vmem:[%s0 + $0x40] sm:$0xf]
    %v30 = vld [vmem:[%s0 + $0x44] sm:$0xf]
    %v31 = vld [vmem:[%s0 + $0x48] sm:$0xf]
    %v32 = vld [vmem:[%s0 + $0x4c] sm:$0xf]
    %v33 = vld [vmem:[%s0 + $0x50] sm:$0xf]
    %v34 = vld [vmem:[%s0 + $0x54] sm:$0xf]
    %v35 = vld [vmem:[%s0 + $0x58] sm:$0xf]
    %v36 = vld [vmem:[%s0 + $0x5c] sm:$0xf]
    %v37 = vld [vmem:[%s0 + $0x60] sm:$0xf]
    %v38 = vld [vmem:[%s0 + $0x64] sm:$0xf]
    %v39 = vld [vmem:[%s0 + $0x68] sm:$0xf]
    %v40 = vld [vmem:[%s0 + $0x6c] sm:$0xf]
    %v41 = vld [vmem:[%s0 + $0x70] sm:$0xf]
    %v42 = vld [vmem:[%s0 + $0x74] sm:$0xf]
    %v43 = vld [vmem:[%s0 + $0x78] sm:$0xf]
    %v44 = vld [vmem:[%s0 + $0x7c] sm:$0xf]
    %v45 = vld [vmem:[%s1] sm:$0xf]
    %v46 = vld [vmem:[%s1 + $0x4] sm:$0xf]
    %v47 = vld [vmem:[%s1 + $0x8] sm:$0xf]
    %v48 = vld [vmem:[%s1 + $0xc] sm:$0xf]
    %v81 = vunpack.c.l.b16 %v13
    %v82 = vunpack.c.l.b16 %v14
    %v83 = vunpack.c.l.b16 %v15
    %v84 = vunpack.c.l.b16 %v16
    %v85 = vunpack.c.l.b16 %v17
    %v86 = vunpack.c.l.b16 %v18
    %v87 = vunpack.c.l.b16 %v19
    %v88 = vunpack.c.l.b16 %v20
    %v89 = vunpack.c.l.b16 %v21
    %v90 = vunpack.c.l.b16 %v22
    %v91 = vunpack.c.l.b16 %v23
    %v92 = vunpack.c.l.b16 %v24
    %v93 = vunpack.c.l.b16 %v25
    %v94 = vunpack.c.l.b16 %v26
    %v95 = vunpack.c.l.b16 %v27
    %v96 = vunpack.c.l.b16 %v28
    %v97 = vunpack.c.l.b16 %v29
    %v98 = vunpack.c.l.b16 %v30
    %v99 = vunpack.c.l.b16 %v31
    %v100 = vunpack.c.l.b16 %v32
    %v101 = vunpack.c.l.b16 %v33
    %v102 = vunpack.c.l.b16 %v34
    %v103 = vunpack.c.l.b16 %v35
    %v104 = vunpack.c.l.b16 %v36
    %v105 = vunpack.c.l.b16 %v37
    %v106 = vunpack.c.l.b16 %v38
    %v107 = vunpack.c.l.b16 %v39
    %v108 = vunpack.c.l.b16 %v40
    %v109 = vunpack.c.l.b16 %v41
    %v110 = vunpack.c.l.b16 %v42
    %v111 = vunpack.c.l.b16 %v43
    %v112 = vunpack.c.l.b16 %v44
    %v113 = vpack.c.b16 %v82, %v81
    %v114 = vpack.c.b16 %v84, %v83
    %v115 = vpack.c.b16 %v86, %v85
    %v116 = vpack.c.b16 %v88, %v87
    %v117 = vpack.c.b16 %v90, %v89
    %v118 = vpack.c.b16 %v92, %v91
    %v119 = vpack.c.b16 %v94, %v93
    %v120 = vpack.c.b16 %v96, %v95
    %v121 = vpack.c.b16 %v98, %v97
    %v122 = vpack.c.b16 %v100, %v99
    %v123 = vpack.c.b16 %v102, %v101
    %v124 = vpack.c.b16 %v104, %v103
    %v125 = vpack.c.b16 %v106, %v105
    %v126 = vpack.c.b16 %v108, %v107
    %v127 = vpack.c.b16 %v110, %v109
    %v128 = vpack.c.b16 %v112, %v111
    %v133 = vunpack.c.l.b16 %v45
    %v134 = vunpack.c.l.b16 %v46
    %v135 = vunpack.c.l.b16 %v47
    %v136 = vunpack.c.l.b16 %v48
    %v137 = vpack.c.b16 %v134, %v133
    %v138 = vpack.c.b16 %v136, %v135
    %vm141 = vcmask 261120
    %v143 = vsel %vm141, %v113, 0
    %v146 = vsel %vm141, %v114, 0
    %v149 = vsel %vm141, %v115, 0
    %v152 = vsel %vm141, %v116, 0
    %v155 = vsel %vm141, %v117, 0
    %v158 = vsel %vm141, %v118, 0
    %v161 = vsel %vm141, %v119, 0
    %v164 = vsel %vm141, %v120, 0
    %v167 = vsel %vm141, %v121, 0
    %v170 = vsel %vm141, %v122, 0
    %v173 = vsel %vm141, %v123, 0
    %v176 = vsel %vm141, %v124, 0
    %v179 = vsel %vm141, %v125, 0
    %v182 = vsel %vm141, %v126, 0
    %v185 = vsel %vm141, %v127, 0
    %v188 = vsel %vm141, %v128, 0
    %190 = vmatprep.subr.bf16.mxu0 0
    %191 = vmatpush1.bf16.msra.mxu0 %v137
    %192 = vmatprep.subr.bf16.mxu0 0
    %193 = vmatpush1.bf16.msra.mxu0 %v138
    %194 = vmatprep.subr.bf16.mxu0 0
    %195 = vmatpush1.bf16.msra.mxu0 0
    %196 = vmatprep.subr.bf16.mxu0 0
    %197 = vmatpush1.bf16.msra.mxu0 0
    %198 = vmatprep.subr.bf16.mxu0 0
    %199 = vmatpush1.bf16.msra.mxu0 0
    %200 = vmatprep.subr.bf16.mxu0 0
    %201 = vmatpush1.bf16.msra.mxu0 0
    %202 = vmatprep.subr.bf16.mxu0 0
    %203 = vmatpush1.bf16.msra.mxu0 0
    %204 = vmatprep.subr.bf16.mxu0 0
    %205 = vmatpush1.bf16.msra.mxu0 0
    %206 = vmatprep.subr.bf16.mxu0 0
    %207 = vmatpush1.bf16.msra.mxu0 0
    %208 = vmatprep.subr.bf16.mxu0 0
    %209 = vmatpush1.bf16.msra.mxu0 0
    %210 = vmatprep.subr.bf16.mxu0 0
    %211 = vmatpush1.bf16.msra.mxu0 0
    %212 = vmatprep.subr.bf16.mxu0 0
    %213 = vmatpush1.bf16.msra.mxu0 0
    %214 = vmatprep.subr.bf16.mxu0 0
    %215 = vmatpush1.bf16.msra.mxu0 0
    %216 = vmatprep.subr.bf16.mxu0 0
    %217 = vmatpush1.bf16.msra.mxu0 0
    %218 = vmatprep.subr.bf16.mxu0 0
    %219 = vmatpush1.bf16.msra.mxu0 0
    %220 = vmatprep.subr.bf16.mxu0 0
    %221 = vmatpush1.bf16.msra.mxu0 0
    %222 = vmatprep.mubr.bf16.mxu0 0
    %223 = vmatmul.mubr.bf16.gmra.mrb[0].mxu0 %v143
    %v224 = vpop.f32.mrb[0].mxu0
    %v225 = vadd.f32 0.0, %v224
    %v226 = vpop.f32.mrb[0].mxu0
    %v227 = vpop.f32.mrb[0].mxu0
    %v228 = vadd.f32 0.0, %v227
    %v229 = vpop.f32.mrb[0].mxu0
    %230 = vmatprep.mubr.bf16.mxu0 0
    %231 = vmatmul.mubr.bf16.gmra.mrb[0].mxu0 %v146
    %v232 = vpop.f32.mrb[0].mxu0
    %v233 = vadd.f32 0.0, %v232
    %v234 = vpop.f32.mrb[0].mxu0
    %v235 = vpop.f32.mrb[0].mxu0
    %v236 = vadd.f32 0.0, %v235
    %v237 = vpop.f32.mrb[0].mxu0
    %238 = vmatprep.mubr.bf16.mxu0 0
    %239 = vmatmul.mubr.bf16.gmra.mrb[0].mxu0 %v149
    %v240 = vpop.f32.mrb[0].mxu0
    %v241 = vadd.f32 0.0, %v240
    %v242 = vpop.f32.mrb[0].mxu0
    %v243 = vpop.f32.mrb[0].mxu0
    %v244 = vadd.f32 0.0, %v243
    %v245 = vpop.f32.mrb[0].mxu0
    %246 = vmatprep.mubr.bf16.mxu0 0
    %247 = vmatmul.mubr.bf16.gmra.mrb[0].mxu0 %v152
    %v248 = vpop.f32.mrb[0].mxu0
    %v249 = vadd.f32 0.0, %v248
    %v250 = vpop.f32.mrb[0].mxu0
    %v251 = vpop.f32.mrb[0].mxu0
    %v252 = vadd.f32 0.0, %v251
    %v253 = vpop.f32.mrb[0].mxu0
    %254 = vmatprep.mubr.bf16.mxu0 0
    %255 = vmatmul.mubr.bf16.gmra.mrb[0].mxu0 %v155
    %v256 = vpop.f32.mrb[0].mxu0
    %v257 = vadd.f32 0.0, %v256
    %v258 = vpop.f32.mrb[0].mxu0
    %v259 = vpop.f32.mrb[0].mxu0
    %v260 = vadd.f32 0.0, %v259
    %v261 = vpop.f32.mrb[0].mxu0
    %262 = vmatprep.mubr.bf16.mxu0 0
    %263 = vmatmul.mubr.bf16.gmra.mrb[0].mxu0 %v158
    %v264 = vpop.f32.mrb[0].mxu0
    %v265 = vadd.f32 0.0, %v264
    %v266 = vpop.f32.mrb[0].mxu0
    %v267 = vpop.f32.mrb[0].mxu0
    %v268 = vadd.f32 0.0, %v267
    %v269 = vpop.f32.mrb[0].mxu0
    %270 = vmatprep.mubr.bf16.mxu0 0
    %271 = vmatmul.mubr.bf16.gmra.mrb[0].mxu0 %v161
    %v272 = vpop.f32.mrb[0].mxu0
    %v273 = vadd.f32 0.0, %v272
    %v274 = vpop.f32.mrb[0].mxu0
    %v275 = vpop.f32.mrb[0].mxu0
    %v276 = vadd.f32 0.0, %v275
    %v277 = vpop.f32.mrb[0].mxu0
    %278 = vmatprep.mubr.bf16.mxu0 0
    %279 = vmatmul.mubr.bf16.gmra.mrb[0].mxu0 %v164
    %v280 = vpop.f32.mrb[0].mxu0
    %v281 = vadd.f32 0.0, %v280
    %v282 = vpop.f32.mrb[0].mxu0
    %v283 = vpop.f32.mrb[0].mxu0
    %v284 = vadd.f32 0.0, %v283
    %v285 = vpop.f32.mrb[0].mxu0
    %286 = vmatprep.mubr.bf16.mxu0 0
    %287 = vmatmul.mubr.bf16.gmra.mrb[0].mxu0 %v167
    %v288 = vpop.f32.mrb[0].mxu0
    %v289 = vadd.f32 0.0, %v288
    %v290 = vpop.f32.mrb[0].mxu0
    %v291 = vpop.f32.mrb[0].mxu0
    %v292 = vadd.f32 0.0, %v291
    %v293 = vpop.f32.mrb[0].mxu0
    %294 = vmatprep.mubr.bf16.mxu0 0
    %295 = vmatmul.mubr.bf16.gmra.mrb[0].mxu0 %v170
    %v296 = vpop.f32.mrb[0].mxu0
    %v297 = vadd.f32 0.0, %v296
    %v298 = vpop.f32.mrb[0].mxu0
    %v299 = vpop.f32.mrb[0].mxu0
    %v300 = vadd.f32 0.0, %v299
    %v301 = vpop.f32.mrb[0].mxu0
    %302 = vmatprep.mubr.bf16.mxu0 0
    %303 = vmatmul.mubr.bf16.gmra.mrb[0].mxu0 %v173
    %v304 = vpop.f32.mrb[0].mxu0
    %v305 = vadd.f32 0.0, %v304
    %v306 = vpop.f32.mrb[0].mxu0
    %v307 = vpop.f32.mrb[0].mxu0
    %v308 = vadd.f32 0.0, %v307
    %v309 = vpop.f32.mrb[0].mxu0
    %310 = vmatprep.mubr.bf16.mxu0 0
    %311 = vmatmul.mubr.bf16.gmra.mrb[0].mxu0 %v176
    %v312 = vpop.f32.mrb[0].mxu0
    %v313 = vadd.f32 0.0, %v312
    %v314 = vpop.f32.mrb[0].mxu0
    %v315 = vpop.f32.mrb[0].mxu0
    %v316 = vadd.f32 0.0, %v315
    %v317 = vpop.f32.mrb[0].mxu0
    %318 = vmatprep.mubr.bf16.mxu0 0
    %319 = vmatmul.mubr.bf16.gmra.mrb[0].mxu0 %v179
    %v320 = vpop.f32.mrb[0].mxu0
    %v321 = vadd.f32 0.0, %v320
    %v322 = vpop.f32.mrb[0].mxu0
    %v323 = vpop.f32.mrb[0].mxu0
    %v324 = vadd.f32 0.0, %v323
    %v325 = vpop.f32.mrb[0].mxu0
    %326 = vmatprep.mubr.bf16.mxu0 0
    %327 = vmatmul.mubr.bf16.gmra.mrb[0].mxu0 %v182
    %v328 = vpop.f32.mrb[0].mxu0
    %v329 = vadd.f32 0.0, %v328
    %v330 = vpop.f32.mrb[0].mxu0
    %v331 = vpop.f32.mrb[0].mxu0
    %v332 = vadd.f32 0.0, %v331
    %v333 = vpop.f32.mrb[0].mxu0
    %334 = vmatprep.mubr.bf16.mxu0 0
    %335 = vmatmul.mubr.bf16.gmra.mrb[0].mxu0 %v185
    %v336 = vpop.f32.mrb[0].mxu0
    %v337 = vadd.f32 0.0, %v336
    %v338 = vpop.f32.mrb[0].mxu0
    %v339 = vpop.f32.mrb[0].mxu0
    %v340 = vadd.f32 0.0, %v339
    %v341 = vpop.f32.mrb[0].mxu0
    %342 = vmatprep.mubr.bf16.mxu0 0
    %343 = vmatmul.mubr.bf16.gmra.mrb[0].mxu0 %v188
    %v344 = vpop.f32.mrb[0].mxu0
    %v345 = vadd.f32 0.0, %v344
    %v346 = vpop.f32.mrb[0].mxu0
    %v347 = vpop.f32.mrb[0].mxu0
    %v348 = vadd.f32 0.0, %v347
    %v349 = vpop.f32.mrb[0].mxu0
    %350 = vdwg.mxu0
    %v351 = vpack.c.bf16 %v228, %v225
    %v352 = vpack.c.bf16 %v236, %v233
    %v353 = vpack.c.bf16 %v244, %v241
    %v354 = vpack.c.bf16 %v252, %v249
    %v355 = vpack.c.bf16 %v260, %v257
    %v356 = vpack.c.bf16 %v268, %v265
    %v357 = vpack.c.bf16 %v276, %v273
    %v358 = vpack.c.bf16 %v284, %v281
    %v359 = vpack.c.bf16 %v292, %v289
    %v360 = vpack.c.bf16 %v300, %v297
    %v361 = vpack.c.bf16 %v308, %v305
    %v362 = vpack.c.bf16 %v316, %v313
    %v363 = vpack.c.bf16 %v324, %v321
    %v364 = vpack.c.bf16 %v332, %v329
    %v365 = vpack.c.bf16 %v340, %v337
    %v366 = vpack.c.bf16 %v348, %v345
    %v383 = vunpack.c.l.b16 %v351
    %v384 = vunpack.c.h.b16 %v351
    %v385 = vunpack.c.l.b16 %v352
    %v386 = vunpack.c.h.b16 %v352
    %v387 = vunpack.c.l.b16 %v353
    %v388 = vunpack.c.h.b16 %v353
    %v389 = vunpack.c.l.b16 %v354
    %v390 = vunpack.c.h.b16 %v354
    %v391 = vunpack.c.l.b16 %v355
    %v392 = vunpack.c.h.b16 %v355
    %v393 = vunpack.c.l.b16 %v356
    %v394 = vunpack.c.h.b16 %v356
    %v395 = vunpack.c.l.b16 %v357
    %v396 = vunpack.c.h.b16 %v357
    %v397 = vunpack.c.l.b16 %v358
    %v398 = vunpack.c.h.b16 %v358
    %v399 = vunpack.c.l.b16 %v359
    %v400 = vunpack.c.h.b16 %v359
    %v401 = vunpack.c.l.b16 %v360
    %v402 = vunpack.c.h.b16 %v360
    %v403 = vunpack.c.l.b16 %v361
    %v404 = vunpack.c.h.b16 %v361
    %v405 = vunpack.c.l.b16 %v362
    %v406 = vunpack.c.h.b16 %v362
    %v407 = vunpack.c.l.b16 %v363
    %v408 = vunpack.c.h.b16 %v363
    %v409 = vunpack.c.l.b16 %v364
    %v410 = vunpack.c.h.b16 %v364
    %v411 = vunpack.c.l.b16 %v365
    %v412 = vunpack.c.h.b16 %v365
    %v413 = vunpack.c.l.b16 %v366
    %v414 = vunpack.c.h.b16 %v366
    %v415 = vpack.c.b16 %v383, %v383
    %v416 = vpack.c.b16 %v384, %v384
    %v417 = vpack.c.b16 %v385, %v385
    %v418 = vpack.c.b16 %v386, %v386
    %v419 = vpack.c.b16 %v387, %v387
    %v420 = vpack.c.b16 %v388, %v388
    %v421 = vpack.c.b16 %v389, %v389
    %v422 = vpack.c.b16 %v390, %v390
    %v423 = vpack.c.b16 %v391, %v391
    %v424 = vpack.c.b16 %v392, %v392
    %v425 = vpack.c.b16 %v393, %v393
    %v426 = vpack.c.b16 %v394, %v394
    %v427 = vpack.c.b16 %v395, %v395
    %v428 = vpack.c.b16 %v396, %v396
    %v429 = vpack.c.b16 %v397, %v397
    %v430 = vpack.c.b16 %v398, %v398
    %v431 = vpack.c.b16 %v399, %v399
    %v432 = vpack.c.b16 %v400, %v400
    %v433 = vpack.c.b16 %v401, %v401
    %v434 = vpack.c.b16 %v402, %v402
    %v435 = vpack.c.b16 %v403, %v403
    %v436 = vpack.c.b16 %v404, %v404
    %v437 = vpack.c.b16 %v405, %v405
    %v438 = vpack.c.b16 %v406, %v406
    %v439 = vpack.c.b16 %v407, %v407
    %v440 = vpack.c.b16 %v408, %v408
    %v441 = vpack.c.b16 %v409, %v409
    %v442 = vpack.c.b16 %v410, %v410
    %v443 = vpack.c.b16 %v411, %v411
    %v444 = vpack.c.b16 %v412, %v412
    %v445 = vpack.c.b16 %v413, %v413
    %v446 = vpack.c.b16 %v414, %v414
    %479 = vst [vmem:[#allocation2] sm:$0xf] %v415
    %480 = vst [vmem:[#allocation2 + $0x4] sm:$0xf] %v416
    %481 = vst [vmem:[#allocation2 + $0x8] sm:$0xf] %v417
    %482 = vst [vmem:[#allocation2 + $0xc] sm:$0xf] %v418
    %483 = vst [vmem:[#allocation2 + $0x10] sm:$0xf] %v419
    %484 = vst [vmem:[#allocation2 + $0x14] sm:$0xf] %v420
    %485 = vst [vmem:[#allocation2 + $0x18] sm:$0xf] %v421
    %486 = vst [vmem:[#allocation2 + $0x1c] sm:$0xf] %v422
    %487 = vst [vmem:[#allocation2 + $0x20] sm:$0xf] %v423
    %488 = vst [vmem:[#allocation2 + $0x24] sm:$0xf] %v424
    %489 = vst [vmem:[#allocation2 + $0x28] sm:$0xf] %v425
    %490 = vst [vmem:[#allocation2 + $0x2c] sm:$0xf] %v426
    %491 = vst [vmem:[#allocation2 + $0x30] sm:$0xf] %v427
    %492 = vst [vmem:[#allocation2 + $0x34] sm:$0xf] %v428
    %493 = vst [vmem:[#allocation2 + $0x38] sm:$0xf] %v429
    %494 = vst [vmem:[#allocation2 + $0x3c] sm:$0xf] %v430
    %495 = vst [vmem:[#allocation2 + $0x40] sm:$0xf] %v431
    %496 = vst [vmem:[#allocation2 + $0x44] sm:$0xf] %v432
    %497 = vst [vmem:[#allocation2 + $0x48] sm:$0xf] %v433
    %498 = vst [vmem:[#allocation2 + $0x4c] sm:$0xf] %v434
    %499 = vst [vmem:[#allocation2 + $0x50] sm:$0xf] %v435
    %500 = vst [vmem:[#allocation2 + $0x54] sm:$0xf] %v436
    %501 = vst [vmem:[#allocation2 + $0x58] sm:$0xf] %v437
    %502 = vst [vmem:[#allocation2 + $0x5c] sm:$0xf] %v438
    %503 = vst [vmem:[#allocation2 + $0x60] sm:$0xf] %v439
    %504 = vst [vmem:[#allocation2 + $0x64] sm:$0xf] %v440
    %505 = vst [vmem:[#allocation2 + $0x68] sm:$0xf] %v441
    %506 = vst [vmem:[#allocation2 + $0x6c] sm:$0xf] %v442
    %507 = vst [vmem:[#allocation2 + $0x70] sm:$0xf] %v443
    %508 = vst [vmem:[#allocation2 + $0x74] sm:$0xf] %v444
    %509 = vst [vmem:[#allocation2 + $0x78] sm:$0xf] %v445
    %510 = vst [vmem:[#allocation2 + $0x7c] sm:$0xf] %v446
    // Predicated region
    $region10: #{tpu_custom_call.1} parent=1 // pred_check
      _
    $region11: #{tpu_custom_call.1} parent=1 // pred_check_branch
      %512 = sbr.rel (0) target = $region13
    $region12: #{tpu_custom_call.1} parent=1 // pred_region
      %s514 = ssub.s32 2048, 2048
      %515 = vsyncadd [#allocation3], %s514
      %s516 = sshll.u32 [#allocation2], 4
      %s517 = int_to_ptr.vmem [resolvable:$true] %s516
      %522 = dma.vmem_to_hbm [thread:$0]  %s517, 2048, %s2, [#allocation3], 64, 64, 4
    $region13: #{tpu_custom_call.1} parent=1 // pred_fallthru
      _
    // Predicated region
    $region14: #{tpu_custom_call.1} parent=1 // pred_check
      _
    $region15: #{tpu_custom_call.1} parent=1 // pred_check_branch
      %524 = sbr.rel (0) target = $region17
    $region16: #{tpu_custom_call.1} parent=1 // pred_region
      %525 = dma.done [#allocation3], 2048
    $region17: #{tpu_custom_call.1} parent=1 // pred_fallthru
      _
    %526 = vsyncpa [#allocation3], 1

</llo_original>
